<compile_context>
chip_gen: v6e
topology: v6e:2x2x1
jax: 0.10.0
libtpu: 0.0.40
codegen_flags: <defaults>
</compile_context>

<pallas_src>
import jax
import jax.numpy as jnp
from jax.experimental import pallas as pl
from jax.experimental.pallas import tpu as pltpu

HIDDEN = 32     # matches torch.nn.Linear(x_dim, 32)
LANE = 128      # TPU lane width (class dim padded to a multiple of this)
SUBLANE = 8     # f32 sublane granularity (batch tile multiple of this)


def _mlp_small_kernel(x_ref, w1_ref, b1_ref, w2_ref, b2_ref, o_ref):
    # One batch tile per grid step; weights/biases use constant index_maps so
    # they are the same VMEM-resident block every step.
    x = x_ref[...]                                                     # [TB, x_dim]

    # Hidden layer: h = relu(x @ W1 + b1)   (f32 MXU accumulation)
    h = jnp.dot(x, w1_ref[...],
                preferred_element_type=jnp.float32,
                precision=jax.lax.Precision.HIGHEST)                   # [TB, 32]
    h = jnp.maximum(h + b1_ref[...], 0.0)                              # b1: [1, 32]

    # Output layer logits (padded to LANE features): z = h @ W2p + b2p.
    # Pad lanes carry bias -1e30 -> exp underflows to 0, so the softmax
    # denominator only counts real classes.
    z = jnp.dot(h, w2_ref[...],
                preferred_element_type=jnp.float32,
                precision=jax.lax.Precision.HIGHEST)                   # [TB, 128]
    z = z + b2_ref[...]                                                # b2p: [1, 128]

    # Numerically stable softmax over the class axis (torch dim=1).
    # Exact divide (NOT approx reciprocal): rows must sum to 1 tightly, and the
    # kernel is memory-bound so the divide cost is hidden under the DMA.
    m = jnp.max(z, axis=-1, keepdims=True)
    e = jnp.exp(z - m)
    s = jnp.sum(e, axis=-1, keepdims=True)
    o_ref[...] = (e / s).astype(o_ref.dtype)       # lane-dense, unmasked store


def prepare_params(w1, b1, w2, b2):
    """One-time parameter prep (hoisted out of the forward path).

    w1: [x_dim, 32], b1: [32], w2: [32, y_dim], b2: [y_dim]  (already [in, out]).
    Pads the class dim of W2/b2 to a multiple of 128 lanes so the kernel's
    output store is unmasked/lane-dense; pad-lane biases are -1e30 so their
    softmax probability is exactly 0.
    """
    hidden, y_dim = w2.shape
    n_pad = ((y_dim + LANE - 1) // LANE) * LANE
    w1_f = jnp.asarray(w1, jnp.float32)
    b1_2d = jnp.asarray(b1, jnp.float32).reshape(1, hidden)
    w2_p = jnp.zeros((hidden, n_pad), jnp.float32).at[:, :y_dim].set(
        jnp.asarray(w2, jnp.float32))
    b2_p = jnp.full((1, n_pad), -1e30, jnp.float32).at[0, :y_dim].set(
        jnp.asarray(b2, jnp.float32))
    return (w1_f, b1_2d, w2_p, b2_p, y_dim)


def mlp_small_forward(x, params, *, batch_tile=4096, out_dtype=jnp.float32,
                      slice_output=True, vmem_limit_bytes=32 * 1024 * 1024):
    """x: [B, x_dim] (f32, or bf16 if the producer already has bf16).

    params: output of prepare_params().
    out_dtype=jnp.bfloat16 halves the dominant output writeback stream.
    slice_output=False returns the padded [B, 128] buffer (lets a jitted
    consumer index the real classes instead of paying an extra HBM pass here).
    """
    w1, b1_2d, w2_p, b2_p, y_dim = params
    B, x_dim = x.shape
    hidden = w1.shape[1]
    n_pad = w2_p.shape[1]

    # ---- batch tile: large enough to amortize per-step overhead, capped so the
    # double-buffered x + out streams stay inside the VMEM budget (v7x: 64 MiB
    # physical / 32 MiB scoped default per TC). Weights are tiny (<32 KiB).
    row_bytes = 2 * (x_dim * x.dtype.itemsize + n_pad * jnp.dtype(out_dtype).itemsize)
    budget = vmem_limit_bytes - (2 << 20)          # headroom for resident weights etc.
    max_tb = max(SUBLANE, (budget // row_bytes) // SUBLANE * SUBLANE)
    tb = min(batch_tile, max_tb, ((B + SUBLANE - 1) // SUBLANE) * SUBLANE)

    # Pad the batch only if the tile doesn't divide it (never for the default
    # power-of-two batch sizes) — avoids an extra read+write pass over x.
    b_pad = ((B + tb - 1) // tb) * tb
    x_in = x if b_pad == B else jnp.zeros((b_pad, x_dim), x.dtype).at[:B].set(x)

    grid = (b_pad // tb,)

    out = pl.pallas_call(
        _mlp_small_kernel,
        out_shape=jax.ShapeDtypeStruct((b_pad, n_pad), out_dtype),
        grid=grid,
        in_specs=[
            pl.BlockSpec((tb, x_dim), lambda i: (i, 0)),       # x: streamed per tile
            pl.BlockSpec((x_dim, hidden), lambda i: (0, 0)),   # W1: resident
            pl.BlockSpec((1, hidden), lambda i: (0, 0)),       # b1: resident
            pl.BlockSpec((hidden, n_pad), lambda i: (0, 0)),   # W2 (padded): resident
            pl.BlockSpec((1, n_pad), lambda i: (0, 0)),        # b2 (padded): resident
        ],
        out_specs=pl.BlockSpec((tb, n_pad), lambda i: (i, 0)), # out: streamed per tile
        compiler_params=pltpu.CompilerParams(
            dimension_semantics=("parallel",),   # shard batch tiles across TCs (v7x)
            vmem_limit_bytes=vmem_limit_bytes,
        ),
    )(x_in, w1, b1_2d, w2_p, b2_p)

    if slice_output:
        return out[:B, :y_dim]
    return out[:B]   # padded [B, 128]; caller indexes the first y_dim columns


def _init_params(key, x_dim, y_dim):
    """Deterministic init mimicking torch.nn.Linear's U(-1/sqrt(fan_in), ...).

    Weights are stored already transposed to [in, out] for the kernel.
    """
    k1, k2, k3, k4 = jax.random.split(key, 4)
    bound1 = 1.0 / jnp.sqrt(jnp.float32(x_dim))
    bound2 = 1.0 / jnp.sqrt(jnp.float32(HIDDEN))
    w1 = jax.random.uniform(k1, (x_dim, HIDDEN), jnp.float32, -bound1, bound1)
    b1 = jax.random.uniform(k2, (HIDDEN,), jnp.float32, -bound1, bound1)
    w2 = jax.random.uniform(k3, (HIDDEN, y_dim), jnp.float32, -bound2, bound2)
    b2 = jax.random.uniform(k4, (y_dim,), jnp.float32, -bound2, bound2)
    return w1, b1, w2, b2


def _reference(x, w1, b1, w2, b2):
    h = jnp.maximum(x @ w1 + b1, 0.0)
    return jax.nn.softmax(h @ w2 + b2, axis=1)


if __name__ == "__main__":
    B, X_DIM, Y_DIM = 8, 64, 10  # small shapes consistent with the module

    key = jax.random.PRNGKey(0)
    kx, kp = jax.random.split(key)
    x = jax.random.normal(kx, (B, X_DIM), jnp.float32)
    w1, b1, w2, b2 = _init_params(kp, X_DIM, Y_DIM)

    params = prepare_params(w1, b1, w2, b2)      # one-time prep, not per forward
    out = mlp_small_forward(x, params)
    out = jax.block_until_ready(out)

    ref = _reference(x, w1, b1, w2, b2)
    assert out.shape == (B, Y_DIM)
    assert jnp.allclose(out, ref, atol=1e-3, rtol=1e-3)
    # Exact normalization: softmax rows sum to 1.
    assert jnp.allclose(jnp.sum(out, axis=1), jnp.ones((B,)), atol=1e-3)

    print("KERNEL_OK")
</pallas_src>

<mosaic_0001>
module attributes {stable_mosaic.version = 11 : i64} {
  func.func @_mlp_small_kernel(%arg0: i32, %arg1: memref<8x64xf32, #tpu.memory_space<vmem>>, %arg2: memref<64x32xf32, #tpu.memory_space<vmem>>, %arg3: memref<1x32xf32, #tpu.memory_space<vmem>>, %arg4: memref<32x128xf32, #tpu.memory_space<vmem>>, %arg5: memref<1x128xf32, #tpu.memory_space<vmem>>, %arg6: memref<8x128xf32, #tpu.memory_space<vmem>>) attributes {dimension_semantics = [#tpu.dimension_semantics<parallel>], iteration_bounds = array<i64: 1>, scalar_prefetch = 0 : i64, scratch_operands = 0 : i64, tpu.core_type = #tpu.core_type<tc>, window_params = [{transform_indices = @transform_0, window_bounds = array<i64: 8, 64>}, {pipeline_mode = #tpu.pipeline_mode<synchronous>, transform_indices = @transform_1, window_bounds = array<i64: 64, 32>}, {pipeline_mode = #tpu.pipeline_mode<synchronous>, transform_indices = @transform_2, window_bounds = array<i64: 1, 32>}, {pipeline_mode = #tpu.pipeline_mode<synchronous>, transform_indices = @transform_3, window_bounds = array<i64: 32, 128>}, {pipeline_mode = #tpu.pipeline_mode<synchronous>, transform_indices = @transform_4, window_bounds = array<i64: 1, 128>}, {transform_indices = @transform_5, window_bounds = array<i64: 8, 128>}]} {
    %c0 = arith.constant 0 : index
    %c0_0 = arith.constant 0 : index
    %0 = vector.load %arg1[%c0, %c0_0] : memref<8x64xf32, #tpu.memory_space<vmem>>, vector<8x64xf32>
    %c0_1 = arith.constant 0 : index
    %c0_2 = arith.constant 0 : index
    %1 = vector.load %arg2[%c0_1, %c0_2] : memref<64x32xf32, #tpu.memory_space<vmem>>, vector<64x32xf32>
    %cst = arith.constant dense<0.000000e+00> : vector<8x32xf32>
    %2 = tpu.matmul %0, %1, %cst {dimension_numbers = #tpu.dot_dimension_numbers<[1], [0], [0], [1], [0, 0, 1, 1], [], []>, precision = #tpu.contract_precision<fp32>} : vector<8x64xf32>, vector<64x32xf32>, vector<8x32xf32> -> vector<8x32xf32>
    %c0_3 = arith.constant 0 : index
    %c0_4 = arith.constant 0 : index
    %3 = vector.load %arg3[%c0_3, %c0_4] : memref<1x32xf32, #tpu.memory_space<vmem>>, vector<1x32xf32>
    %4 = vector.broadcast %3 : vector<1x32xf32> to vector<8x32xf32>
    %5 = arith.addf %2, %4 : vector<8x32xf32>
    %cst_5 = arith.constant 0.000000e+00 : f32
    %6 = vector.broadcast %cst_5 : f32 to vector<8x32xf32>
    %7 = arith.maximumf %5, %6 : vector<8x32xf32>
    %c0_6 = arith.constant 0 : index
    %c0_7 = arith.constant 0 : index
    %8 = vector.load %arg4[%c0_6, %c0_7] : memref<32x128xf32, #tpu.memory_space<vmem>>, vector<32x128xf32>
    %cst_8 = arith.constant dense<0.000000e+00> : vector<8x128xf32>
    %9 = tpu.matmul %7, %8, %cst_8 {dimension_numbers = #tpu.dot_dimension_numbers<[1], [0], [0], [1], [0, 0, 1, 1], [], []>, precision = #tpu.contract_precision<fp32>} : vector<8x32xf32>, vector<32x128xf32>, vector<8x128xf32> -> vector<8x128xf32>
    %c0_9 = arith.constant 0 : index
    %c0_10 = arith.constant 0 : index
    %10 = vector.load %arg5[%c0_9, %c0_10] : memref<1x128xf32, #tpu.memory_space<vmem>>, vector<1x128xf32>
    %11 = vector.broadcast %10 : vector<1x128xf32> to vector<8x128xf32>
    %12 = arith.addf %9, %11 : vector<8x128xf32>
    %cst_11 = arith.constant dense<0xFF800000> : vector<8xf32>
    %13 = vector.multi_reduction <maximumf>, %12, %cst_11 [1] : vector<8x128xf32> to vector<8xf32>
    %14 = vector.shape_cast %13 : vector<8xf32> to vector<8x1xf32>
    %15 = vector.broadcast %14 : vector<8x1xf32> to vector<8x128xf32>
    %16 = arith.subf %12, %15 : vector<8x128xf32>
    %17 = math.exp %16 : vector<8x128xf32>
    %cst_12 = arith.constant dense<0.000000e+00> : vector<8xf32>
    %18 = vector.multi_reduction <add>, %17, %cst_12 [1] : vector<8x128xf32> to vector<8xf32>
    %19 = vector.shape_cast %18 : vector<8xf32> to vector<8x1xf32>
    %20 = vector.broadcast %19 : vector<8x1xf32> to vector<8x128xf32>
    %21 = arith.divf %17, %20 : vector<8x128xf32>
    %c0_13 = arith.constant 0 : index
    %c0_14 = arith.constant 0 : index
    %22 = vector.load %arg6[%c0_13, %c0_14] : memref<8x128xf32, #tpu.memory_space<vmem>>, vector<8x128xf32>
    tpu.vector_store %arg6[%c0_13, %c0_14], %21 {strides = array<i32>} : memref<8x128xf32, #tpu.memory_space<vmem>>, vector<8x128xf32>,
    return
  }
  func.func @transform_0(%arg0: i32) -> (i32, i32) {
    %c0_i32 = arith.constant 0 : i32
    %c0_i32_0 = arith.constant 0 : i32
    return %arg0, %c0_i32 : i32, i32
  }
  func.func @transform_1(%arg0: i32) -> (i32, i32) {
    %c0_i32 = arith.constant 0 : i32
    %c0_i32_0 = arith.constant 0 : i32
    %c0_i32_1 = arith.constant 0 : i32
    return %c0_i32, %c0_i32_0 : i32, i32
  }
  func.func @transform_2(%arg0: i32) -> (i32, i32) {
    %c0_i32 = arith.constant 0 : i32
    %c0_i32_0 = arith.constant 0 : i32
    %c0_i32_1 = arith.constant 0 : i32
    return %c0_i32, %c0_i32_0 : i32, i32
  }
  func.func @transform_3(%arg0: i32) -> (i32, i32) {
    %c0_i32 = arith.constant 0 : i32
    %c0_i32_0 = arith.constant 0 : i32
    %c0_i32_1 = arith.constant 0 : i32
    return %c0_i32, %c0_i32_0 : i32, i32
  }
  func.func @transform_4(%arg0: i32) -> (i32, i32) {
    %c0_i32 = arith.constant 0 : i32
    %c0_i32_0 = arith.constant 0 : i32
    %c0_i32_1 = arith.constant 0 : i32
    return %c0_i32, %c0_i32_0 : i32, i32
  }
  func.func @transform_5(%arg0: i32) -> (i32, i32) {
    %c0_i32 = arith.constant 0 : i32
    %c0_i32_0 = arith.constant 0 : i32
    return %arg0, %c0_i32 : i32, i32
  }
}

</mosaic_0001>

<llo_original>
// kernel: tpu_custom_call.1
$region0: #{tpu_custom_call.1}
  #allocation0 [shape = 'u32[]', space=smem, size = 0x4, offset = 0x4, fixed_abs, tag = 'smem constant byte address 0x4 - core index']
  #allocation1 [shape = 'u32[144,128]{1,0:T(1,128)}', space=vmem, size = 0x12000, scoped, tag = 'internal scratch']
  %s0 = inlined_call_operand.vmem [shape: f32[8,64], index: 0, kind: input, shape index: {}]
  %s1 = inlined_call_operand.vmem [shape: f32[64,32], index: 1, kind: input, shape index: {}]
  %s2 = inlined_call_operand.vmem [shape: f32[1,32], index: 2, kind: input, shape index: {}]
  %s3 = inlined_call_operand.vmem [shape: f32[32,128], index: 3, kind: input, shape index: {}]
  %s4 = inlined_call_operand.vmem [shape: f32[1,128], index: 4, kind: input, shape index: {}]
  %s5 = inlined_call_operand.hbm [shape: f32[8,128], index: 5, kind: output, shape index: {}]
  %s6 = sld [smem:[#allocation0]]
  $region30: #{tpu_custom_call.1} parent=0
    _
  %s8 = ssub.s32 1, %s6
  %s9 = scalar_select 0, %s8, %s6
  $region1: #{tpu_custom_call.1} parent=0
    #allocation2 [shape = 'u8[4096]{0}', space=vmem, size = 0x1000, scoped, tag = 'output window, operand 0, single buffered']
    #allocation3 [shape = 's32[1]{0}', space=sflag, size = 0x4, scoped, tag = 'scoped memory for tpu_custom_call.1']
    %10 = vsyncpa [#allocation3], 0
    // Predicated region
    $region2: #{tpu_custom_call.1} parent=1 // pred_check
      _
    $region3: #{tpu_custom_call.1} parent=1 // pred_check_branch
      %12 = sbr.rel (0) target = $region5
    $region4: #{tpu_custom_call.1} parent=1 // pred_region
      _
    $region5: #{tpu_custom_call.1} parent=1 // pred_fallthru
      _
    // Predicated region
    $region6: #{tpu_custom_call.1} parent=1 // pred_check
      _
    $region7: #{tpu_custom_call.1} parent=1 // pred_check_branch
      %14 = sbr.rel (0) target = $region9
    $region8: #{tpu_custom_call.1} parent=1 // pred_region
      _
    $region9: #{tpu_custom_call.1} parent=1 // pred_fallthru
      _
    // Predicated region
    $region10: #{tpu_custom_call.1} parent=1 // pred_check
      _
    $region11: #{tpu_custom_call.1} parent=1 // pred_check_branch
      %16 = sbr.rel (0) target = $region13
    $region12: #{tpu_custom_call.1} parent=1 // pred_region
      _
    $region13: #{tpu_custom_call.1} parent=1 // pred_fallthru
      _
    // Predicated region
    $region14: #{tpu_custom_call.1} parent=1 // pred_check
      _
    $region15: #{tpu_custom_call.1} parent=1 // pred_check_branch
      %18 = sbr.rel (0) target = $region17
    $region16: #{tpu_custom_call.1} parent=1 // pred_region
      _
    $region17: #{tpu_custom_call.1} parent=1 // pred_fallthru
      _
    // Predicated region
    $region18: #{tpu_custom_call.1} parent=1 // pred_check
      _
    $region19: #{tpu_custom_call.1} parent=1 // pred_check_branch
      %20 = sbr.rel (0) target = $region21
    $region20: #{tpu_custom_call.1} parent=1 // pred_region
      _
    $region21: #{tpu_custom_call.1} parent=1 // pred_fallthru
      _
    %v21 = vld [vmem:[%s0] sm:$0xff]
    %v22 = vld [vmem:[%s1] sm:$0xff]
    %v23 = vld [vmem:[%s1 + $0x8] sm:$0xff]
    %v24 = vld [vmem:[%s1 + $0x10] sm:$0xff]
    %v25 = vld [vmem:[%s1 + $0x18] sm:$0xff]
    %v26 = vld [vmem:[%s1 + $0x20] sm:$0xff]
    %v27 = vld [vmem:[%s1 + $0x28] sm:$0xff]
    %v28 = vld [vmem:[%s1 + $0x30] sm:$0xff]
    %v29 = vld [vmem:[%s1 + $0x38] sm:$0xff]
    %v30 = vld [vmem:[%s2] sm:$0x1]
    %v32 = vlaneseq
    %v33 = vshrl.u32 %v32, 7
    %v34 = vsub.s32 0, %v33
    %v35 = vrot.slane %v30, %v34
    %vm37 = vcmask 523264
    %v39 = vsel %vm37, %v21, 0
    %41 = vmatprep.subr.mxu0 0.0
    %42 = vmatpush1.msra.mxu0 0.0
    %43 = vmatprep.subr.mxu0 0.0
    %44 = vmatpush1.msra.mxu0 0.0
    %45 = vmatprep.subr.mxu0 0.0
    %46 = vmatpush1.msra.mxu0 0.0
    %47 = vmatprep.subr.mxu0 0.0
    %48 = vmatpush1.msra.mxu0 0.0
    %49 = vmatprep.subr.mxu0 0.0
    %50 = vmatpush1.msra.mxu0 0.0
    %51 = vmatprep.subr.mxu0 0.0
    %52 = vmatpush1.msra.mxu0 0.0
    %53 = vmatprep.subr.mxu0 0.0
    %54 = vmatpush1.msra.mxu0 0.0
    %55 = vmatprep.subr.mxu0 0.0
    %56 = vmatpush1.msra.mxu0 0.0
    %57 = vmatprep.subr.mxu0 0.0
    %v58 = vand.u32 %v29, 4294901760
    %59 = vmatpush1.msra.mxu0 %v58
    %60 = vmatprep.subr.mxu0 0.0
    %v61 = vand.u32 %v28, 4294901760
    %62 = vmatpush1.msra.mxu0 %v61
    %63 = vmatprep.subr.mxu0 0.0
    %v64 = vand.u32 %v27, 4294901760
    %65 = vmatpush1.msra.mxu0 %v64
    %66 = vmatprep.subr.mxu0 0.0
    %v67 = vand.u32 %v26, 4294901760
    %68 = vmatpush1.msra.mxu0 %v67
    %69 = vmatprep.subr.mxu0 0.0
    %v70 = vand.u32 %v25, 4294901760
    %71 = vmatpush1.msra.mxu0 %v70
    %72 = vmatprep.subr.mxu0 0.0
    %v73 = vand.u32 %v24, 4294901760
    %74 = vmatpush1.msra.mxu0 %v73
    %75 = vmatprep.subr.mxu0 0.0
    %v76 = vand.u32 %v23, 4294901760
    %77 = vmatpush1.msra.mxu0 %v76
    %78 = vmatprep.subr.mxu0 0.0
    %v79 = vand.u32 %v22, 4294901760
    %80 = vmatpush1.msra.mxu0 %v79
    %81 = vmatprep.subr.mxu0 0.0
    %82 = vmatpush2.msra.mxu0 0.0
    %83 = vmatprep.subr.mxu0 0.0
    %84 = vmatpush2.msra.mxu0 0.0
    %85 = vmatprep.subr.mxu0 0.0
    %86 = vmatpush2.msra.mxu0 0.0
    %87 = vmatprep.subr.mxu0 0.0
    %88 = vmatpush2.msra.mxu0 0.0
    %89 = vmatprep.subr.mxu0 0.0
    %90 = vmatpush2.msra.mxu0 0.0
    %91 = vmatprep.subr.mxu0 0.0
    %92 = vmatpush2.msra.mxu0 0.0
    %93 = vmatprep.subr.mxu0 0.0
    %94 = vmatpush2.msra.mxu0 0.0
    %95 = vmatprep.subr.mxu0 0.0
    %96 = vmatpush2.msra.mxu0 0.0
    %97 = vmatprep.subr.mxu0 0.0
    %98 = vmatpush2.msra.mxu0 0.0
    %99 = vmatprep.subr.mxu0 0.0
    %100 = vmatpush2.msra.mxu0 0.0
    %101 = vmatprep.subr.mxu0 0.0
    %102 = vmatpush2.msra.mxu0 0.0
    %103 = vmatprep.subr.mxu0 0.0
    %104 = vmatpush2.msra.mxu0 0.0
    %105 = vmatprep.subr.mxu0 0.0
    %106 = vmatpush2.msra.mxu0 0.0
    %107 = vmatprep.subr.mxu0 0.0
    %108 = vmatpush2.msra.mxu0 0.0
    %109 = vmatprep.subr.mxu0 0.0
    %110 = vmatpush2.msra.mxu0 0.0
    %111 = vmatprep.subr.mxu0 0.0
    %112 = vmatpush2.msra.mxu0 0.0
    %113 = vmatprep.mubr.f32.mxu0 0.0
    %v114 = vand.u32 %v39, 4294901760
    %v115 = vsub.f32 %v39, %v114
    %v116 = vand.u32 %v115, 4294901760
    %v117 = vsub.f32 %v115, %v116
    %v118 = vand.u32 %v117, 4294901760
    %119 = vmatmul.mubr.f32.gmra.mxu0 %v118
    %v120 = vpop.f32.mrf.mxu0
    %v121 = vadd.f32 %v35, %v120
    %v122 = vpop.f32.mrf.mxu0
    %123 = vdwg.mxu0
    %124 = vmatprep.subr.mxu0 0.0
    %125 = vmatpush1.msra.mxu0 0.0
    %126 = vmatprep.subr.mxu0 0.0
    %127 = vmatpush1.msra.mxu0 0.0
    %128 = vmatprep.subr.mxu0 0.0
    %129 = vmatpush1.msra.mxu0 0.0
    %130 = vmatprep.subr.mxu0 0.0
    %131 = vmatpush1.msra.mxu0 0.0
    %132 = vmatprep.subr.mxu0 0.0
    %133 = vmatpush1.msra.mxu0 0.0
    %134 = vmatprep.subr.mxu0 0.0
    %135 = vmatpush1.msra.mxu0 0.0
    %136 = vmatprep.subr.mxu0 0.0
    %137 = vmatpush1.msra.mxu0 0.0
    %138 = vmatprep.subr.mxu0 0.0
    %139 = vmatpush1.msra.mxu0 0.0
    %140 = vmatprep.subr.mxu0 0.0
    %v141 = vand.u32 %v29, 4294901760
    %v142 = vsub.f32 %v29, %v141
    %v143 = vand.u32 %v142, 4294901760
    %v144 = vsub.f32 %v142, %v143
    %v145 = vand.u32 %v144, 4294901760
    %146 = vmatpush1.msra.mxu0 %v145
    %147 = vmatprep.subr.mxu0 0.0
    %v148 = vand.u32 %v28, 4294901760
    %v149 = vsub.f32 %v28, %v148
    %v150 = vand.u32 %v149, 4294901760
    %v151 = vsub.f32 %v149, %v150
    %v152 = vand.u32 %v151, 4294901760
    %153 = vmatpush1.msra.mxu0 %v152
    %154 = vmatprep.subr.mxu0 0.0
    %v155 = vand.u32 %v27, 4294901760
    %v156 = vsub.f32 %v27, %v155
    %v157 = vand.u32 %v156, 4294901760
    %v158 = vsub.f32 %v156, %v157
    %v159 = vand.u32 %v158, 4294901760
    %160 = vmatpush1.msra.mxu0 %v159
    %161 = vmatprep.subr.mxu0 0.0
    %v162 = vand.u32 %v26, 4294901760
    %v163 = vsub.f32 %v26, %v162
    %v164 = vand.u32 %v163, 4294901760
    %v165 = vsub.f32 %v163, %v164
    %v166 = vand.u32 %v165, 4294901760
    %167 = vmatpush1.msra.mxu0 %v166
    %168 = vmatprep.subr.mxu0 0.0
    %v169 = vand.u32 %v25, 4294901760
    %v170 = vsub.f32 %v25, %v169
    %v171 = vand.u32 %v170, 4294901760
    %v172 = vsub.f32 %v170, %v171
    %v173 = vand.u32 %v172, 4294901760
    %174 = vmatpush1.msra.mxu0 %v173
    %175 = vmatprep.subr.mxu0 0.0
    %v176 = vand.u32 %v24, 4294901760
    %v177 = vsub.f32 %v24, %v176
    %v178 = vand.u32 %v177, 4294901760
    %v179 = vsub.f32 %v177, %v178
    %v180 = vand.u32 %v179, 4294901760
    %181 = vmatpush1.msra.mxu0 %v180
    %182 = vmatprep.subr.mxu0 0.0
    %v183 = vand.u32 %v23, 4294901760
    %v184 = vsub.f32 %v23, %v183
    %v185 = vand.u32 %v184, 4294901760
    %v186 = vsub.f32 %v184, %v185
    %v187 = vand.u32 %v186, 4294901760
    %188 = vmatpush1.msra.mxu0 %v187
    %189 = vmatprep.subr.mxu0 0.0
    %v190 = vand.u32 %v22, 4294901760
    %v191 = vsub.f32 %v22, %v190
    %v192 = vand.u32 %v191, 4294901760
    %v193 = vsub.f32 %v191, %v192
    %v194 = vand.u32 %v193, 4294901760
    %195 = vmatpush1.msra.mxu0 %v194
    %196 = vmatprep.subr.mxu0 0.0
    %197 = vmatpush2.msra.mxu0 0.0
    %198 = vmatprep.subr.mxu0 0.0
    %199 = vmatpush2.msra.mxu0 0.0
    %200 = vmatprep.subr.mxu0 0.0
    %201 = vmatpush2.msra.mxu0 0.0
    %202 = vmatprep.subr.mxu0 0.0
    %203 = vmatpush2.msra.mxu0 0.0
    %204 = vmatprep.subr.mxu0 0.0
    %205 = vmatpush2.msra.mxu0 0.0
    %206 = vmatprep.subr.mxu0 0.0
    %207 = vmatpush2.msra.mxu0 0.0
    %208 = vmatprep.subr.mxu0 0.0
    %209 = vmatpush2.msra.mxu0 0.0
    %210 = vmatprep.subr.mxu0 0.0
    %211 = vmatpush2.msra.mxu0 0.0
    %212 = vmatprep.subr.mxu0 0.0
    %213 = vmatpush2.msra.mxu0 0.0
    %214 = vmatprep.subr.mxu0 0.0
    %215 = vmatpush2.msra.mxu0 0.0
    %216 = vmatprep.subr.mxu0 0.0
    %217 = vmatpush2.msra.mxu0 0.0
    %218 = vmatprep.subr.mxu0 0.0
    %219 = vmatpush2.msra.mxu0 0.0
    %220 = vmatprep.subr.mxu0 0.0
    %221 = vmatpush2.msra.mxu0 0.0
    %222 = vmatprep.subr.mxu0 0.0
    %223 = vmatpush2.msra.mxu0 0.0
    %224 = vmatprep.subr.mxu0 0.0
    %225 = vmatpush2.msra.mxu0 0.0
    %226 = vmatprep.subr.mxu0 0.0
    %227 = vmatpush2.msra.mxu0 0.0
    %228 = vmatprep.mubr.f32.mxu0 0.0
    %v229 = vand.u32 %v39, 4294901760
    %230 = vmatmul.mubr.f32.gmra.mxu0 %v229
    %v231 = vpop.f32.mrf.mxu0
    %v232 = vadd.f32 %v121, %v231
    %v233 = vpop.f32.mrf.mxu0
    %234 = vdwg.mxu0
    %235 = vmatprep.subr.mxu0 0.0
    %236 = vmatpush1.msra.mxu0 0.0
    %237 = vmatprep.subr.mxu0 0.0
    %238 = vmatpush1.msra.mxu0 0.0
    %239 = vmatprep.subr.mxu0 0.0
    %240 = vmatpush1.msra.mxu0 0.0
    %241 = vmatprep.subr.mxu0 0.0
    %242 = vmatpush1.msra.mxu0 0.0
    %243 = vmatprep.subr.mxu0 0.0
    %244 = vmatpush1.msra.mxu0 0.0
    %245 = vmatprep.subr.mxu0 0.0
    %246 = vmatpush1.msra.mxu0 0.0
    %247 = vmatprep.subr.mxu0 0.0
    %248 = vmatpush1.msra.mxu0 0.0
    %249 = vmatprep.subr.mxu0 0.0
    %250 = vmatpush1.msra.mxu0 0.0
    %251 = vmatprep.subr.mxu0 0.0
    %v252 = vand.u32 %v29, 4294901760
    %v253 = vsub.f32 %v29, %v252
    %254 = vmatpush1.msra.mxu0 %v253
    %255 = vmatprep.subr.mxu0 0.0
    %v256 = vand.u32 %v28, 4294901760
    %v257 = vsub.f32 %v28, %v256
    %258 = vmatpush1.msra.mxu0 %v257
    %259 = vmatprep.subr.mxu0 0.0
    %v260 = vand.u32 %v27, 4294901760
    %v261 = vsub.f32 %v27, %v260
    %262 = vmatpush1.msra.mxu0 %v261
    %263 = vmatprep.subr.mxu0 0.0
    %v264 = vand.u32 %v26, 4294901760
    %v265 = vsub.f32 %v26, %v264
    %266 = vmatpush1.msra.mxu0 %v265
    %267 = vmatprep.subr.mxu0 0.0
    %v268 = vand.u32 %v25, 4294901760
    %v269 = vsub.f32 %v25, %v268
    %270 = vmatpush1.msra.mxu0 %v269
    %271 = vmatprep.subr.mxu0 0.0
    %v272 = vand.u32 %v24, 4294901760
    %v273 = vsub.f32 %v24, %v272
    %274 = vmatpush1.msra.mxu0 %v273
    %275 = vmatprep.subr.mxu0 0.0
    %v276 = vand.u32 %v23, 4294901760
    %v277 = vsub.f32 %v23, %v276
    %278 = vmatpush1.msra.mxu0 %v277
    %279 = vmatprep.subr.mxu0 0.0
    %v280 = vand.u32 %v22, 4294901760
    %v281 = vsub.f32 %v22, %v280
    %282 = vmatpush1.msra.mxu0 %v281
    %283 = vmatprep.subr.mxu0 0.0
    %284 = vmatpush2.msra.mxu0 0.0
    %285 = vmatprep.subr.mxu0 0.0
    %286 = vmatpush2.msra.mxu0 0.0
    %287 = vmatprep.subr.mxu0 0.0
    %288 = vmatpush2.msra.mxu0 0.0
    %289 = vmatprep.subr.mxu0 0.0
    %290 = vmatpush2.msra.mxu0 0.0
    %291 = vmatprep.subr.mxu0 0.0
    %292 = vmatpush2.msra.mxu0 0.0
    %293 = vmatprep.subr.mxu0 0.0
    %294 = vmatpush2.msra.mxu0 0.0
    %295 = vmatprep.subr.mxu0 0.0
    %296 = vmatpush2.msra.mxu0 0.0
    %297 = vmatprep.subr.mxu0 0.0
    %298 = vmatpush2.msra.mxu0 0.0
    %299 = vmatprep.subr.mxu0 0.0
    %300 = vmatpush2.msra.mxu0 0.0
    %301 = vmatprep.subr.mxu0 0.0
    %302 = vmatpush2.msra.mxu0 0.0
    %303 = vmatprep.subr.mxu0 0.0
    %304 = vmatpush2.msra.mxu0 0.0
    %305 = vmatprep.subr.mxu0 0.0
    %306 = vmatpush2.msra.mxu0 0.0
    %307 = vmatprep.subr.mxu0 0.0
    %308 = vmatpush2.msra.mxu0 0.0
    %309 = vmatprep.subr.mxu0 0.0
    %310 = vmatpush2.msra.mxu0 0.0
    %311 = vmatprep.subr.mxu0 0.0
    %312 = vmatpush2.msra.mxu0 0.0
    %313 = vmatprep.subr.mxu0 0.0
    %314 = vmatpush2.msra.mxu0 0.0
    %315 = vmatprep.mubr.f32.mxu0 0.0
    %v316 = vand.u32 %v39, 4294901760
    %v317 = vsub.f32 %v39, %v316
    %318 = vmatmul.mubr.f32.gmra.mxu0 %v317
    %v319 = vpop.f32.mrf.mxu0
    %v320 = vadd.f32 %v232, %v319
    %v321 = vpop.f32.mrf.mxu0
    %322 = vdwg.mxu0
    %323 = vmatprep.subr.mxu0 0.0
    %324 = vmatpush1.msra.mxu0 0.0
    %325 = vmatprep.subr.mxu0 0.0
    %326 = vmatpush1.msra.mxu0 0.0
    %327 = vmatprep.subr.mxu0 0.0
    %328 = vmatpush1.msra.mxu0 0.0
    %329 = vmatprep.subr.mxu0 0.0
    %330 = vmatpush1.msra.mxu0 0.0
    %331 = vmatprep.subr.mxu0 0.0
    %332 = vmatpush1.msra.mxu0 0.0
    %333 = vmatprep.subr.mxu0 0.0
    %334 = vmatpush1.msra.mxu0 0.0
    %335 = vmatprep.subr.mxu0 0.0
    %336 = vmatpush1.msra.mxu0 0.0
    %337 = vmatprep.subr.mxu0 0.0
    %338 = vmatpush1.msra.mxu0 0.0
    %339 = vmatprep.subr.mxu0 0.0
    %v340 = vand.u32 %v29, 4294901760
    %341 = vmatpush1.msra.mxu0 %v340
    %342 = vmatprep.subr.mxu0 0.0
    %v343 = vand.u32 %v28, 4294901760
    %344 = vmatpush1.msra.mxu0 %v343
    %345 = vmatprep.subr.mxu0 0.0
    %v346 = vand.u32 %v27, 4294901760
    %347 = vmatpush1.msra.mxu0 %v346
    %348 = vmatprep.subr.mxu0 0.0
    %v349 = vand.u32 %v26, 4294901760
    %350 = vmatpush1.msra.mxu0 %v349
    %351 = vmatprep.subr.mxu0 0.0
    %v352 = vand.u32 %v25, 4294901760
    %353 = vmatpush1.msra.mxu0 %v352
    %354 = vmatprep.subr.mxu0 0.0
    %v355 = vand.u32 %v24, 4294901760
    %356 = vmatpush1.msra.mxu0 %v355
    %357 = vmatprep.subr.mxu0 0.0
    %v358 = vand.u32 %v23, 4294901760
    %359 = vmatpush1.msra.mxu0 %v358
    %360 = vmatprep.subr.mxu0 0.0
    %v361 = vand.u32 %v22, 4294901760
    %362 = vmatpush1.msra.mxu0 %v361
    %363 = vmatprep.subr.mxu0 0.0
    %364 = vmatpush2.msra.mxu0 0.0
    %365 = vmatprep.subr.mxu0 0.0
    %366 = vmatpush2.msra.mxu0 0.0
    %367 = vmatprep.subr.mxu0 0.0
    %368 = vmatpush2.msra.mxu0 0.0
    %369 = vmatprep.subr.mxu0 0.0
    %370 = vmatpush2.msra.mxu0 0.0
    %371 = vmatprep.subr.mxu0 0.0
    %372 = vmatpush2.msra.mxu0 0.0
    %373 = vmatprep.subr.mxu0 0.0
    %374 = vmatpush2.msra.mxu0 0.0
    %375 = vmatprep.subr.mxu0 0.0
    %376 = vmatpush2.msra.mxu0 0.0
    %377 = vmatprep.subr.mxu0 0.0
    %378 = vmatpush2.msra.mxu0 0.0
    %379 = vmatprep.subr.mxu0 0.0
    %380 = vmatpush2.msra.mxu0 0.0
    %381 = vmatprep.subr.mxu0 0.0
    %382 = vmatpush2.msra.mxu0 0.0
    %383 = vmatprep.subr.mxu0 0.0
    %384 = vmatpush2.msra.mxu0 0.0
    %385 = vmatprep.subr.mxu0 0.0
    %386 = vmatpush2.msra.mxu0 0.0
    %387 = vmatprep.subr.mxu0 0.0
    %388 = vmatpush2.msra.mxu0 0.0
    %389 = vmatprep.subr.mxu0 0.0
    %390 = vmatpush2.msra.mxu0 0.0
    %391 = vmatprep.subr.mxu0 0.0
    %392 = vmatpush2.msra.mxu0 0.0
    %393 = vmatprep.subr.mxu0 0.0
    %394 = vmatpush2.msra.mxu0 0.0
    %395 = vmatprep.mubr.f32.mxu0 0.0
    %v396 = vand.u32 %v39, 4294901760
    %v397 = vsub.f32 %v39, %v396
    %v398 = vand.u32 %v397, 4294901760
    %399 = vmatmul.mubr.f32.gmra.mxu0 %v398
    %v400 = vpop.f32.mrf.mxu0
    %v401 = vadd.f32 %v320, %v400
    %v402 = vpop.f32.mrf.mxu0
    %403 = vdwg.mxu0
    %404 = vmatprep.subr.mxu0 0.0
    %405 = vmatpush1.msra.mxu0 0.0
    %406 = vmatprep.subr.mxu0 0.0
    %407 = vmatpush1.msra.mxu0 0.0
    %408 = vmatprep.subr.mxu0 0.0
    %409 = vmatpush1.msra.mxu0 0.0
    %410 = vmatprep.subr.mxu0 0.0
    %411 = vmatpush1.msra.mxu0 0.0
    %412 = vmatprep.subr.mxu0 0.0
    %413 = vmatpush1.msra.mxu0 0.0
    %414 = vmatprep.subr.mxu0 0.0
    %415 = vmatpush1.msra.mxu0 0.0
    %416 = vmatprep.subr.mxu0 0.0
    %417 = vmatpush1.msra.mxu0 0.0
    %418 = vmatprep.subr.mxu0 0.0
    %419 = vmatpush1.msra.mxu0 0.0
    %420 = vmatprep.subr.mxu0 0.0
    %v421 = vand.u32 %v29, 4294901760
    %v422 = vsub.f32 %v29, %v421
    %v423 = vand.u32 %v422, 4294901760
    %424 = vmatpush1.msra.mxu0 %v423
    %425 = vmatprep.subr.mxu0 0.0
    %v426 = vand.u32 %v28, 4294901760
    %v427 = vsub.f32 %v28, %v426
    %v428 = vand.u32 %v427, 4294901760
    %429 = vmatpush1.msra.mxu0 %v428
    %430 = vmatprep.subr.mxu0 0.0
    %v431 = vand.u32 %v27, 4294901760
    %v432 = vsub.f32 %v27, %v431
    %v433 = vand.u32 %v432, 4294901760
    %434 = vmatpush1.msra.mxu0 %v433
    %435 = vmatprep.subr.mxu0 0.0
    %v436 = vand.u32 %v26, 4294901760
    %v437 = vsub.f32 %v26, %v436
    %v438 = vand.u32 %v437, 4294901760
    %439 = vmatpush1.msra.mxu0 %v438
    %440 = vmatprep.subr.mxu0 0.0
    %v441 = vand.u32 %v25, 4294901760
    %v442 = vsub.f32 %v25, %v441
    %v443 = vand.u32 %v442, 4294901760
    %444 = vmatpush1.msra.mxu0 %v443
    %445 = vmatprep.subr.mxu0 0.0
    %v446 = vand.u32 %v24, 4294901760
    %v447 = vsub.f32 %v24, %v446
    %v448 = vand.u32 %v447, 4294901760
    %449 = vmatpush1.msra.mxu0 %v448
    %450 = vmatprep.subr.mxu0 0.0
    %v451 = vand.u32 %v23, 4294901760
    %v452 = vsub.f32 %v23, %v451
    %v453 = vand.u32 %v452, 4294901760
    %454 = vmatpush1.msra.mxu0 %v453
    %455 = vmatprep.subr.mxu0 0.0
    %v456 = vand.u32 %v22, 4294901760
    %v457 = vsub.f32 %v22, %v456
    %v458 = vand.u32 %v457, 4294901760
    %459 = vmatpush1.msra.mxu0 %v458
    %460 = vmatprep.subr.mxu0 0.0
    %461 = vmatpush2.msra.mxu0 0.0
    %462 = vmatprep.subr.mxu0 0.0
    %463 = vmatpush2.msra.mxu0 0.0
    %464 = vmatprep.subr.mxu0 0.0
    %465 = vmatpush2.msra.mxu0 0.0
    %466 = vmatprep.subr.mxu0 0.0
    %467 = vmatpush2.msra.mxu0 0.0
    %468 = vmatprep.subr.mxu0 0.0
    %469 = vmatpush2.msra.mxu0 0.0
    %470 = vmatprep.subr.mxu0 0.0
    %471 = vmatpush2.msra.mxu0 0.0
    %472 = vmatprep.subr.mxu0 0.0
    %473 = vmatpush2.msra.mxu0 0.0
    %474 = vmatprep.subr.mxu0 0.0
    %475 = vmatpush2.msra.mxu0 0.0
    %476 = vmatprep.subr.mxu0 0.0
    %477 = vmatpush2.msra.mxu0 0.0
    %478 = vmatprep.subr.mxu0 0.0
    %479 = vmatpush2.msra.mxu0 0.0
    %480 = vmatprep.subr.mxu0 0.0
    %481 = vmatpush2.msra.mxu0 0.0
    %482 = vmatprep.subr.mxu0 0.0
    %483 = vmatpush2.msra.mxu0 0.0
    %484 = vmatprep.subr.mxu0 0.0
    %485 = vmatpush2.msra.mxu0 0.0
    %486 = vmatprep.subr.mxu0 0.0
    %487 = vmatpush2.msra.mxu0 0.0
    %488 = vmatprep.subr.mxu0 0.0
    %489 = vmatpush2.msra.mxu0 0.0
    %490 = vmatprep.subr.mxu0 0.0
    %491 = vmatpush2.msra.mxu0 0.0
    %492 = vmatprep.mubr.f32.mxu0 0.0
    %v493 = vand.u32 %v39, 4294901760
    %494 = vmatmul.mubr.f32.gmra.mxu0 %v493
    %v495 = vpop.f32.mrf.mxu0
    %v496 = vadd.f32 %v401, %v495
    %v497 = vpop.f32.mrf.mxu0
    %498 = vdwg.mxu0
    %499 = vmatprep.subr.mxu0 0.0
    %500 = vmatpush1.msra.mxu0 0.0
    %501 = vmatprep.subr.mxu0 0.0
    %502 = vmatpush1.msra.mxu0 0.0
    %503 = vmatprep.subr.mxu0 0.0
    %504 = vmatpush1.msra.mxu0 0.0
    %505 = vmatprep.subr.mxu0 0.0
    %506 = vmatpush1.msra.mxu0 0.0
    %507 = vmatprep.subr.mxu0 0.0
    %508 = vmatpush1.msra.mxu0 0.0
    %509 = vmatprep.subr.mxu0 0.0
    %510 = vmatpush1.msra.mxu0 0.0
    %511 = vmatprep.subr.mxu0 0.0
    %512 = vmatpush1.msra.mxu0 0.0
    %513 = vmatprep.subr.mxu0 0.0
    %514 = vmatpush1.msra.mxu0 0.0
    %515 = vmatprep.subr.mxu0 0.0
    %v516 = vand.u32 %v29, 4294901760
    %517 = vmatpush1.msra.mxu0 %v516
    %518 = vmatprep.subr.mxu0 0.0
    %v519 = vand.u32 %v28, 4294901760
    %520 = vmatpush1.msra.mxu0 %v519
    %521 = vmatprep.subr.mxu0 0.0
    %v522 = vand.u32 %v27, 4294901760
    %523 = vmatpush1.msra.mxu0 %v522
    %524 = vmatprep.subr.mxu0 0.0
    %v525 = vand.u32 %v26, 4294901760
    %526 = vmatpush1.msra.mxu0 %v525
    %527 = vmatprep.subr.mxu0 0.0
    %v528 = vand.u32 %v25, 4294901760
    %529 = vmatpush1.msra.mxu0 %v528
    %530 = vmatprep.subr.mxu0 0.0
    %v531 = vand.u32 %v24, 4294901760
    %532 = vmatpush1.msra.mxu0 %v531
    %533 = vmatprep.subr.mxu0 0.0
    %v534 = vand.u32 %v23, 4294901760
    %535 = vmatpush1.msra.mxu0 %v534
    %536 = vmatprep.subr.mxu0 0.0
    %v537 = vand.u32 %v22, 4294901760
    %538 = vmatpush1.msra.mxu0 %v537
    %539 = vmatprep.subr.mxu0 0.0
    %540 = vmatpush2.msra.mxu0 0.0
    %541 = vmatprep.subr.mxu0 0.0
    %542 = vmatpush2.msra.mxu0 0.0
    %543 = vmatprep.subr.mxu0 0.0
    %544 = vmatpush2.msra.mxu0 0.0
    %545 = vmatprep.subr.mxu0 0.0
    %546 = vmatpush2.msra.mxu0 0.0
    %547 = vmatprep.subr.mxu0 0.0
    %548 = vmatpush2.msra.mxu0 0.0
    %549 = vmatprep.subr.mxu0 0.0
    %550 = vmatpush2.msra.mxu0 0.0
    %551 = vmatprep.subr.mxu0 0.0
    %552 = vmatpush2.msra.mxu0 0.0
    %553 = vmatprep.subr.mxu0 0.0
    %554 = vmatpush2.msra.mxu0 0.0
    %555 = vmatprep.subr.mxu0 0.0
    %556 = vmatpush2.msra.mxu0 0.0
    %557 = vmatprep.subr.mxu0 0.0
    %558 = vmatpush2.msra.mxu0 0.0
    %559 = vmatprep.subr.mxu0 0.0
    %560 = vmatpush2.msra.mxu0 0.0
    %561 = vmatprep.subr.mxu0 0.0
    %562 = vmatpush2.msra.mxu0 0.0
    %563 = vmatprep.subr.mxu0 0.0
    %564 = vmatpush2.msra.mxu0 0.0
    %565 = vmatprep.subr.mxu0 0.0
    %566 = vmatpush2.msra.mxu0 0.0
    %567 = vmatprep.subr.mxu0 0.0
    %568 = vmatpush2.msra.mxu0 0.0
    %569 = vmatprep.subr.mxu0 0.0
    %570 = vmatpush2.msra.mxu0 0.0
    %571 = vmatprep.mubr.f32.mxu0 0.0
    %v572 = vand.u32 %v39, 4294901760
    %573 = vmatmul.mubr.f32.gmra.mxu0 %v572
    %v574 = vpop.f32.mrf.mxu0
    %v575 = vadd.f32 %v496, %v574
    %v576 = vpop.f32.mrf.mxu0
    %577 = vdwg.mxu0
    %v578 = vmax.f32 %v575, 0.0
    %v579 = vld [vmem:[%s3] sm:$0xff]
    %v580 = vld [vmem:[%s3 + $0x8] sm:$0xff]
    %v581 = vld [vmem:[%s3 + $0x10] sm:$0xff]
    %v582 = vld [vmem:[%s3 + $0x18] sm:$0xff]
    %v583 = vld [vmem:[%s4] sm:$0x1]
    %v585 = vlaneseq
    %v586 = vshrl.u32 %v585, 7
    %v587 = vsub.s32 0, %v586
    %v588 = vrot.slane %v583, %v587
    %vm590 = vcmask 261120
    %v592 = vsel %vm590, %v578, 0
    %594 = vmatprep.subr.mxu0 0.0
    %595 = vmatpush1.msra.mxu0 0.0
    %596 = vmatprep.subr.mxu0 0.0
    %597 = vmatpush1.msra.mxu0 0.0
    %598 = vmatprep.subr.mxu0 0.0
    %599 = vmatpush1.msra.mxu0 0.0
    %600 = vmatprep.subr.mxu0 0.0
    %601 = vmatpush1.msra.mxu0 0.0
    %602 = vmatprep.subr.mxu0 0.0
    %603 = vmatpush1.msra.mxu0 0.0
    %604 = vmatprep.subr.mxu0 0.0
    %605 = vmatpush1.msra.mxu0 0.0
    %606 = vmatprep.subr.mxu0 0.0
    %607 = vmatpush1.msra.mxu0 0.0
    %608 = vmatprep.subr.mxu0 0.0
    %609 = vmatpush1.msra.mxu0 0.0
    %610 = vmatprep.subr.mxu0 0.0
    %611 = vmatpush1.msra.mxu0 0.0
    %612 = vmatprep.subr.mxu0 0.0
    %613 = vmatpush1.msra.mxu0 0.0
    %614 = vmatprep.subr.mxu0 0.0
    %615 = vmatpush1.msra.mxu0 0.0
    %616 = vmatprep.subr.mxu0 0.0
    %617 = vmatpush1.msra.mxu0 0.0
    %618 = vmatprep.subr.mxu0 0.0
    %v619 = vand.u32 %v582, 4294901760
    %620 = vmatpush1.msra.mxu0 %v619
    %621 = vmatprep.subr.mxu0 0.0
    %v622 = vand.u32 %v581, 4294901760
    %623 = vmatpush1.msra.mxu0 %v622
    %624 = vmatprep.subr.mxu0 0.0
    %v625 = vand.u32 %v580, 4294901760
    %626 = vmatpush1.msra.mxu0 %v625
    %627 = vmatprep.subr.mxu0 0.0
    %v628 = vand.u32 %v579, 4294901760
    %629 = vmatpush1.msra.mxu0 %v628
    %630 = vmatprep.subr.mxu0 0.0
    %631 = vmatpush2.msra.mxu0 0.0
    %632 = vmatprep.subr.mxu0 0.0
    %633 = vmatpush2.msra.mxu0 0.0
    %634 = vmatprep.subr.mxu0 0.0
    %635 = vmatpush2.msra.mxu0 0.0
    %636 = vmatprep.subr.mxu0 0.0
    %637 = vmatpush2.msra.mxu0 0.0
    %638 = vmatprep.subr.mxu0 0.0
    %639 = vmatpush2.msra.mxu0 0.0
    %640 = vmatprep.subr.mxu0 0.0
    %641 = vmatpush2.msra.mxu0 0.0
    %642 = vmatprep.subr.mxu0 0.0
    %643 = vmatpush2.msra.mxu0 0.0
    %644 = vmatprep.subr.mxu0 0.0
    %645 = vmatpush2.msra.mxu0 0.0
    %646 = vmatprep.subr.mxu0 0.0
    %647 = vmatpush2.msra.mxu0 0.0
    %648 = vmatprep.subr.mxu0 0.0
    %649 = vmatpush2.msra.mxu0 0.0
    %650 = vmatprep.subr.mxu0 0.0
    %651 = vmatpush2.msra.mxu0 0.0
    %652 = vmatprep.subr.mxu0 0.0
    %653 = vmatpush2.msra.mxu0 0.0
    %654 = vmatprep.subr.mxu0 0.0
    %655 = vmatpush2.msra.mxu0 0.0
    %656 = vmatprep.subr.mxu0 0.0
    %657 = vmatpush2.msra.mxu0 0.0
    %658 = vmatprep.subr.mxu0 0.0
    %659 = vmatpush2.msra.mxu0 0.0
    %660 = vmatprep.subr.mxu0 0.0
    %661 = vmatpush2.msra.mxu0 0.0
    %662 = vmatprep.mubr.f32.mxu0 0.0
    %v663 = vand.u32 %v592, 4294901760
    %v664 = vsub.f32 %v592, %v663
    %v665 = vand.u32 %v664, 4294901760
    %v666 = vsub.f32 %v664, %v665
    %v667 = vand.u32 %v666, 4294901760
    %668 = vmatmul.mubr.f32.gmra.mxu0 %v667
    %v669 = vpop.f32.mrf.mxu0
    %v670 = vadd.f32 %v588, %v669
    %v671 = vpop.f32.mrf.mxu0
    %672 = vdwg.mxu0
    %673 = vmatprep.subr.mxu0 0.0
    %674 = vmatpush1.msra.mxu0 0.0
    %675 = vmatprep.subr.mxu0 0.0
    %676 = vmatpush1.msra.mxu0 0.0
    %677 = vmatprep.subr.mxu0 0.0
    %678 = vmatpush1.msra.mxu0 0.0
    %679 = vmatprep.subr.mxu0 0.0
    %680 = vmatpush1.msra.mxu0 0.0
    %681 = vmatprep.subr.mxu0 0.0
    %682 = vmatpush1.msra.mxu0 0.0
    %683 = vmatprep.subr.mxu0 0.0
    %684 = vmatpush1.msra.mxu0 0.0
    %685 = vmatprep.subr.mxu0 0.0
    %686 = vmatpush1.msra.mxu0 0.0
    %687 = vmatprep.subr.mxu0 0.0
    %688 = vmatpush1.msra.mxu0 0.0
    %689 = vmatprep.subr.mxu0 0.0
    %690 = vmatpush1.msra.mxu0 0.0
    %691 = vmatprep.subr.mxu0 0.0
    %692 = vmatpush1.msra.mxu0 0.0
    %693 = vmatprep.subr.mxu0 0.0
    %694 = vmatpush1.msra.mxu0 0.0
    %695 = vmatprep.subr.mxu0 0.0
    %696 = vmatpush1.msra.mxu0 0.0
    %697 = vmatprep.subr.mxu0 0.0
    %v698 = vand.u32 %v582, 4294901760
    %v699 = vsub.f32 %v582, %v698
    %v700 = vand.u32 %v699, 4294901760
    %v701 = vsub.f32 %v699, %v700
    %v702 = vand.u32 %v701, 4294901760
    %703 = vmatpush1.msra.mxu0 %v702
    %704 = vmatprep.subr.mxu0 0.0
    %v705 = vand.u32 %v581, 4294901760
    %v706 = vsub.f32 %v581, %v705
    %v707 = vand.u32 %v706, 4294901760
    %v708 = vsub.f32 %v706, %v707
    %v709 = vand.u32 %v708, 4294901760
    %710 = vmatpush1.msra.mxu0 %v709
    %711 = vmatprep.subr.mxu0 0.0
    %v712 = vand.u32 %v580, 4294901760
    %v713 = vsub.f32 %v580, %v712
    %v714 = vand.u32 %v713, 4294901760
    %v715 = vsub.f32 %v713, %v714
    %v716 = vand.u32 %v715, 4294901760
    %717 = vmatpush1.msra.mxu0 %v716
    %718 = vmatprep.subr.mxu0 0.0
    %v719 = vand.u32 %v579, 4294901760
    %v720 = vsub.f32 %v579, %v719
    %v721 = vand.u32 %v720, 4294901760
    %v722 = vsub.f32 %v720, %v721
    %v723 = vand.u32 %v722, 4294901760
    %724 = vmatpush1.msra.mxu0 %v723
    %725 = vmatprep.subr.mxu0 0.0
    %726 = vmatpush2.msra.mxu0 0.0
    %727 = vmatprep.subr.mxu0 0.0
    %728 = vmatpush2.msra.mxu0 0.0
    %729 = vmatprep.subr.mxu0 0.0
    %730 = vmatpush2.msra.mxu0 0.0
    %731 = vmatprep.subr.mxu0 0.0
    %732 = vmatpush2.msra.mxu0 0.0
    %733 = vmatprep.subr.mxu0 0.0
    %734 = vmatpush2.msra.mxu0 0.0
    %735 = vmatprep.subr.mxu0 0.0
    %736 = vmatpush2.msra.mxu0 0.0
    %737 = vmatprep.subr.mxu0 0.0
    %738 = vmatpush2.msra.mxu0 0.0
    %739 = vmatprep.subr.mxu0 0.0
    %740 = vmatpush2.msra.mxu0 0.0
    %741 = vmatprep.subr.mxu0 0.0
    %742 = vmatpush2.msra.mxu0 0.0
    %743 = vmatprep.subr.mxu0 0.0
    %744 = vmatpush2.msra.mxu0 0.0
    %745 = vmatprep.subr.mxu0 0.0
    %746 = vmatpush2.msra.mxu0 0.0
    %747 = vmatprep.subr.mxu0 0.0
    %748 = vmatpush2.msra.mxu0 0.0
    %749 = vmatprep.subr.mxu0 0.0
    %750 = vmatpush2.msra.mxu0 0.0
    %751 = vmatprep.subr.mxu0 0.0
    %752 = vmatpush2.msra.mxu0 0.0
    %753 = vmatprep.subr.mxu0 0.0
    %754 = vmatpush2.msra.mxu0 0.0
    %755 = vmatprep.subr.mxu0 0.0
    %756 = vmatpush2.msra.mxu0 0.0
    %757 = vmatprep.mubr.f32.mxu0 0.0
    %v758 = vand.u32 %v592, 4294901760
    %759 = vmatmul.mubr.f32.gmra.mxu0 %v758
    %v760 = vpop.f32.mrf.mxu0
    %v761 = vadd.f32 %v670, %v760
    %v762 = vpop.f32.mrf.mxu0
    %763 = vdwg.mxu0
    %764 = vmatprep.subr.mxu0 0.0
    %765 = vmatpush1.msra.mxu0 0.0
    %766 = vmatprep.subr.mxu0 0.0
    %767 = vmatpush1.msra.mxu0 0.0
    %768 = vmatprep.subr.mxu0 0.0
    %769 = vmatpush1.msra.mxu0 0.0
    %770 = vmatprep.subr.mxu0 0.0
    %771 = vmatpush1.msra.mxu0 0.0
    %772 = vmatprep.subr.mxu0 0.0
    %773 = vmatpush1.msra.mxu0 0.0
    %774 = vmatprep.subr.mxu0 0.0
    %775 = vmatpush1.msra.mxu0 0.0
    %776 = vmatprep.subr.mxu0 0.0
    %777 = vmatpush1.msra.mxu0 0.0
    %778 = vmatprep.subr.mxu0 0.0
    %779 = vmatpush1.msra.mxu0 0.0
    %780 = vmatprep.subr.mxu0 0.0
    %781 = vmatpush1.msra.mxu0 0.0
    %782 = vmatprep.subr.mxu0 0.0
    %783 = vmatpush1.msra.mxu0 0.0
    %784 = vmatprep.subr.mxu0 0.0
    %785 = vmatpush1.msra.mxu0 0.0
    %786 = vmatprep.subr.mxu0 0.0
    %787 = vmatpush1.msra.mxu0 0.0
    %788 = vmatprep.subr.mxu0 0.0
    %v789 = vand.u32 %v582, 4294901760
    %v790 = vsub.f32 %v582, %v789
    %791 = vmatpush1.msra.mxu0 %v790
    %792 = vmatprep.subr.mxu0 0.0
    %v793 = vand.u32 %v581, 4294901760
    %v794 = vsub.f32 %v581, %v793
    %795 = vmatpush1.msra.mxu0 %v794
    %796 = vmatprep.subr.mxu0 0.0
    %v797 = vand.u32 %v580, 4294901760
    %v798 = vsub.f32 %v580, %v797
    %799 = vmatpush1.msra.mxu0 %v798
    %800 = vmatprep.subr.mxu0 0.0
    %v801 = vand.u32 %v579, 4294901760
    %v802 = vsub.f32 %v579, %v801
    %803 = vmatpush1.msra.mxu0 %v802
    %804 = vmatprep.subr.mxu0 0.0
    %805 = vmatpush2.msra.mxu0 0.0
    %806 = vmatprep.subr.mxu0 0.0
    %807 = vmatpush2.msra.mxu0 0.0
    %808 = vmatprep.subr.mxu0 0.0
    %809 = vmatpush2.msra.mxu0 0.0
    %810 = vmatprep.subr.mxu0 0.0
    %811 = vmatpush2.msra.mxu0 0.0
    %812 = vmatprep.subr.mxu0 0.0
    %813 = vmatpush2.msra.mxu0 0.0
    %814 = vmatprep.subr.mxu0 0.0
    %815 = vmatpush2.msra.mxu0 0.0
    %816 = vmatprep.subr.mxu0 0.0
    %817 = vmatpush2.msra.mxu0 0.0
    %818 = vmatprep.subr.mxu0 0.0
    %819 = vmatpush2.msra.mxu0 0.0
    %820 = vmatprep.subr.mxu0 0.0
    %821 = vmatpush2.msra.mxu0 0.0
    %822 = vmatprep.subr.mxu0 0.0
    %823 = vmatpush2.msra.mxu0 0.0
    %824 = vmatprep.subr.mxu0 0.0
    %825 = vmatpush2.msra.mxu0 0.0
    %826 = vmatprep.subr.mxu0 0.0
    %827 = vmatpush2.msra.mxu0 0.0
    %828 = vmatprep.subr.mxu0 0.0
    %829 = vmatpush2.msra.mxu0 0.0
    %830 = vmatprep.subr.mxu0 0.0
    %831 = vmatpush2.msra.mxu0 0.0
    %832 = vmatprep.subr.mxu0 0.0
    %833 = vmatpush2.msra.mxu0 0.0
    %834 = vmatprep.subr.mxu0 0.0
    %835 = vmatpush2.msra.mxu0 0.0
    %836 = vmatprep.mubr.f32.mxu0 0.0
    %v837 = vand.u32 %v592, 4294901760
    %v838 = vsub.f32 %v592, %v837
    %839 = vmatmul.mubr.f32.gmra.mxu0 %v838
    %v840 = vpop.f32.mrf.mxu0
    %v841 = vadd.f32 %v761, %v840
    %v842 = vpop.f32.mrf.mxu0
    %843 = vdwg.mxu0
    %844 = vmatprep.subr.mxu0 0.0
    %845 = vmatpush1.msra.mxu0 0.0
    %846 = vmatprep.subr.mxu0 0.0
    %847 = vmatpush1.msra.mxu0 0.0
    %848 = vmatprep.subr.mxu0 0.0
    %849 = vmatpush1.msra.mxu0 0.0
    %850 = vmatprep.subr.mxu0 0.0
    %851 = vmatpush1.msra.mxu0 0.0
    %852 = vmatprep.subr.mxu0 0.0
    %853 = vmatpush1.msra.mxu0 0.0
    %854 = vmatprep.subr.mxu0 0.0
    %855 = vmatpush1.msra.mxu0 0.0
    %856 = vmatprep.subr.mxu0 0.0
    %857 = vmatpush1.msra.mxu0 0.0
    %858 = vmatprep.subr.mxu0 0.0
    %859 = vmatpush1.msra.mxu0 0.0
    %860 = vmatprep.subr.mxu0 0.0
    %861 = vmatpush1.msra.mxu0 0.0
    %862 = vmatprep.subr.mxu0 0.0
    %863 = vmatpush1.msra.mxu0 0.0
    %864 = vmatprep.subr.mxu0 0.0
    %865 = vmatpush1.msra.mxu0 0.0
    %866 = vmatprep.subr.mxu0 0.0
    %867 = vmatpush1.msra.mxu0 0.0
    %868 = vmatprep.subr.mxu0 0.0
    %v869 = vand.u32 %v582, 4294901760
    %870 = vmatpush1.msra.mxu0 %v869
    %871 = vmatprep.subr.mxu0 0.0
    %v872 = vand.u32 %v581, 4294901760
    %873 = vmatpush1.msra.mxu0 %v872
    %874 = vmatprep.subr.mxu0 0.0
    %v875 = vand.u32 %v580, 4294901760
    %876 = vmatpush1.msra.mxu0 %v875
    %877 = vmatprep.subr.mxu0 0.0
    %v878 = vand.u32 %v579, 4294901760
    %879 = vmatpush1.msra.mxu0 %v878
    %880 = vmatprep.subr.mxu0 0.0
    %881 = vmatpush2.msra.mxu0 0.0
    %882 = vmatprep.subr.mxu0 0.0
    %883 = vmatpush2.msra.mxu0 0.0
    %884 = vmatprep.subr.mxu0 0.0
    %885 = vmatpush2.msra.mxu0 0.0
    %886 = vmatprep.subr.mxu0 0.0
    %887 = vmatpush2.msra.mxu0 0.0
    %888 = vmatprep.subr.mxu0 0.0
    %889 = vmatpush2.msra.mxu0 0.0
    %890 = vmatprep.subr.mxu0 0.0
    %891 = vmatpush2.msra.mxu0 0.0
    %892 = vmatprep.subr.mxu0 0.0
    %893 = vmatpush2.msra.mxu0 0.0
    %894 = vmatprep.subr.mxu0 0.0
    %895 = vmatpush2.msra.mxu0 0.0
    %896 = vmatprep.subr.mxu0 0.0
    %897 = vmatpush2.msra.mxu0 0.0
    %898 = vmatprep.subr.mxu0 0.0
    %899 = vmatpush2.msra.mxu0 0.0
    %900 = vmatprep.subr.mxu0 0.0
    %901 = vmatpush2.msra.mxu0 0.0
    %902 = vmatprep.subr.mxu0 0.0
    %903 = vmatpush2.msra.mxu0 0.0
    %904 = vmatprep.subr.mxu0 0.0
    %905 = vmatpush2.msra.mxu0 0.0
    %906 = vmatprep.subr.mxu0 0.0
    %907 = vmatpush2.msra.mxu0 0.0
    %908 = vmatprep.subr.mxu0 0.0
    %909 = vmatpush2.msra.mxu0 0.0
    %910 = vmatprep.subr.mxu0 0.0
    %911 = vmatpush2.msra.mxu0 0.0
    %912 = vmatprep.mubr.f32.mxu0 0.0
    %v913 = vand.u32 %v592, 4294901760
    %v914 = vsub.f32 %v592, %v913
    %v915 = vand.u32 %v914, 4294901760
    %916 = vmatmul.mubr.f32.gmra.mxu0 %v915
    %v917 = vpop.f32.mrf.mxu0
    %v918 = vadd.f32 %v841, %v917
    %v919 = vpop.f32.mrf.mxu0
    %920 = vdwg.mxu0
    %921 = vmatprep.subr.mxu0 0.0
    %922 = vmatpush1.msra.mxu0 0.0
    %923 = vmatprep.subr.mxu0 0.0
    %924 = vmatpush1.msra.mxu0 0.0
    %925 = vmatprep.subr.mxu0 0.0
    %926 = vmatpush1.msra.mxu0 0.0
    %927 = vmatprep.subr.mxu0 0.0
    %928 = vmatpush1.msra.mxu0 0.0
    %929 = vmatprep.subr.mxu0 0.0
    %930 = vmatpush1.msra.mxu0 0.0
    %931 = vmatprep.subr.mxu0 0.0
    %932 = vmatpush1.msra.mxu0 0.0
    %933 = vmatprep.subr.mxu0 0.0
    %934 = vmatpush1.msra.mxu0 0.0
    %935 = vmatprep.subr.mxu0 0.0
    %936 = vmatpush1.msra.mxu0 0.0
    %937 = vmatprep.subr.mxu0 0.0
    %938 = vmatpush1.msra.mxu0 0.0
    %939 = vmatprep.subr.mxu0 0.0
    %940 = vmatpush1.msra.mxu0 0.0
    %941 = vmatprep.subr.mxu0 0.0
    %942 = vmatpush1.msra.mxu0 0.0
    %943 = vmatprep.subr.mxu0 0.0
    %944 = vmatpush1.msra.mxu0 0.0
    %945 = vmatprep.subr.mxu0 0.0
    %v946 = vand.u32 %v582, 4294901760
    %v947 = vsub.f32 %v582, %v946
    %v948 = vand.u32 %v947, 4294901760
    %949 = vmatpush1.msra.mxu0 %v948
    %950 = vmatprep.subr.mxu0 0.0
    %v951 = vand.u32 %v581, 4294901760
    %v952 = vsub.f32 %v581, %v951
    %v953 = vand.u32 %v952, 4294901760
    %954 = vmatpush1.msra.mxu0 %v953
    %955 = vmatprep.subr.mxu0 0.0
    %v956 = vand.u32 %v580, 4294901760
    %v957 = vsub.f32 %v580, %v956
    %v958 = vand.u32 %v957, 4294901760
    %959 = vmatpush1.msra.mxu0 %v958
    %960 = vmatprep.subr.mxu0 0.0
    %v961 = vand.u32 %v579, 4294901760
    %v962 = vsub.f32 %v579, %v961
    %v963 = vand.u32 %v962, 4294901760
    %964 = vmatpush1.msra.mxu0 %v963
    %965 = vmatprep.subr.mxu0 0.0
    %966 = vmatpush2.msra.mxu0 0.0
    %967 = vmatprep.subr.mxu0 0.0
    %968 = vmatpush2.msra.mxu0 0.0
    %969 = vmatprep.subr.mxu0 0.0
    %970 = vmatpush2.msra.mxu0 0.0
    %971 = vmatprep.subr.mxu0 0.0
    %972 = vmatpush2.msra.mxu0 0.0
    %973 = vmatprep.subr.mxu0 0.0
    %974 = vmatpush2.msra.mxu0 0.0
    %975 = vmatprep.subr.mxu0 0.0
    %976 = vmatpush2.msra.mxu0 0.0
    %977 = vmatprep.subr.mxu0 0.0
    %978 = vmatpush2.msra.mxu0 0.0
    %979 = vmatprep.subr.mxu0 0.0
    %980 = vmatpush2.msra.mxu0 0.0
    %981 = vmatprep.subr.mxu0 0.0
    %982 = vmatpush2.msra.mxu0 0.0
    %983 = vmatprep.subr.mxu0 0.0
    %984 = vmatpush2.msra.mxu0 0.0
    %985 = vmatprep.subr.mxu0 0.0
    %986 = vmatpush2.msra.mxu0 0.0
    %987 = vmatprep.subr.mxu0 0.0
    %988 = vmatpush2.msra.mxu0 0.0
    %989 = vmatprep.subr.mxu0 0.0
    %990 = vmatpush2.msra.mxu0 0.0
    %991 = vmatprep.subr.mxu0 0.0
    %992 = vmatpush2.msra.mxu0 0.0
    %993 = vmatprep.subr.mxu0 0.0
    %994 = vmatpush2.msra.mxu0 0.0
    %995 = vmatprep.subr.mxu0 0.0
    %996 = vmatpush2.msra.mxu0 0.0
    %997 = vmatprep.mubr.f32.mxu0 0.0
    %v998 = vand.u32 %v592, 4294901760
    %999 = vmatmul.mubr.f32.gmra.mxu0 %v998
    %v1000 = vpop.f32.mrf.mxu0
    %v1001 = vadd.f32 %v918, %v1000
    %v1002 = vpop.f32.mrf.mxu0
    %1003 = vdwg.mxu0
    %1004 = vmatprep.subr.mxu0 0.0
    %1005 = vmatpush1.msra.mxu0 0.0
    %1006 = vmatprep.subr.mxu0 0.0
    %1007 = vmatpush1.msra.mxu0 0.0
    %1008 = vmatprep.subr.mxu0 0.0
    %1009 = vmatpush1.msra.mxu0 0.0
    %1010 = vmatprep.subr.mxu0 0.0
    %1011 = vmatpush1.msra.mxu0 0.0
    %1012 = vmatprep.subr.mxu0 0.0
    %1013 = vmatpush1.msra.mxu0 0.0
    %1014 = vmatprep.subr.mxu0 0.0
    %1015 = vmatpush1.msra.mxu0 0.0
    %1016 = vmatprep.subr.mxu0 0.0
    %1017 = vmatpush1.msra.mxu0 0.0
    %1018 = vmatprep.subr.mxu0 0.0
    %1019 = vmatpush1.msra.mxu0 0.0
    %1020 = vmatprep.subr.mxu0 0.0
    %1021 = vmatpush1.msra.mxu0 0.0
    %1022 = vmatprep.subr.mxu0 0.0
    %1023 = vmatpush1.msra.mxu0 0.0
    %1024 = vmatprep.subr.mxu0 0.0
    %1025 = vmatpush1.msra.mxu0 0.0
    %1026 = vmatprep.subr.mxu0 0.0
    %1027 = vmatpush1.msra.mxu0 0.0
    %1028 = vmatprep.subr.mxu0 0.0
    %v1029 = vand.u32 %v582, 4294901760
    %1030 = vmatpush1.msra.mxu0 %v1029
    %1031 = vmatprep.subr.mxu0 0.0
    %v1032 = vand.u32 %v581, 4294901760
    %1033 = vmatpush1.msra.mxu0 %v1032
    %1034 = vmatprep.subr.mxu0 0.0
    %v1035 = vand.u32 %v580, 4294901760
    %1036 = vmatpush1.msra.mxu0 %v1035
    %1037 = vmatprep.subr.mxu0 0.0
    %v1038 = vand.u32 %v579, 4294901760
    %1039 = vmatpush1.msra.mxu0 %v1038
    %1040 = vmatprep.subr.mxu0 0.0
    %1041 = vmatpush2.msra.mxu0 0.0
    %1042 = vmatprep.subr.mxu0 0.0
    %1043 = vmatpush2.msra.mxu0 0.0
    %1044 = vmatprep.subr.mxu0 0.0
    %1045 = vmatpush2.msra.mxu0 0.0
    %1046 = vmatprep.subr.mxu0 0.0
    %1047 = vmatpush2.msra.mxu0 0.0
    %1048 = vmatprep.subr.mxu0 0.0
    %1049 = vmatpush2.msra.mxu0 0.0
    %1050 = vmatprep.subr.mxu0 0.0
    %1051 = vmatpush2.msra.mxu0 0.0
    %1052 = vmatprep.subr.mxu0 0.0
    %1053 = vmatpush2.msra.mxu0 0.0
    %1054 = vmatprep.subr.mxu0 0.0
    %1055 = vmatpush2.msra.mxu0 0.0
    %1056 = vmatprep.subr.mxu0 0.0
    %1057 = vmatpush2.msra.mxu0 0.0
    %1058 = vmatprep.subr.mxu0 0.0
    %1059 = vmatpush2.msra.mxu0 0.0
    %1060 = vmatprep.subr.mxu0 0.0
    %1061 = vmatpush2.msra.mxu0 0.0
    %1062 = vmatprep.subr.mxu0 0.0
    %1063 = vmatpush2.msra.mxu0 0.0
    %1064 = vmatprep.subr.mxu0 0.0
    %1065 = vmatpush2.msra.mxu0 0.0
    %1066 = vmatprep.subr.mxu0 0.0
    %1067 = vmatpush2.msra.mxu0 0.0
    %1068 = vmatprep.subr.mxu0 0.0
    %1069 = vmatpush2.msra.mxu0 0.0
    %1070 = vmatprep.subr.mxu0 0.0
    %1071 = vmatpush2.msra.mxu0 0.0
    %1072 = vmatprep.mubr.f32.mxu0 0.0
    %v1073 = vand.u32 %v592, 4294901760
    %1074 = vmatmul.mubr.f32.gmra.mxu0 %v1073
    %v1075 = vpop.f32.mrf.mxu0
    %v1076 = vadd.f32 %v1001, %v1075
    %v1077 = vpop.f32.mrf.mxu0
    %1078 = vdwg.mxu0
    %1079 = vmax.xlane.f32.xlu0 %v1076
    %v1080 = vpop.xlane.xlu0 %1079
    %v1081 = vsub.f32 %v1076, %v1080
    %v1082 = vmul.f32 %v1081, 1.442695
    %v1083 = vpow.pop %v1082
    %1084 = vadd.xlane.f32.xlu0 %v1083
    %v1085 = vpop.xlane.xlu0 %1084
    %v1086 = vrcp.pop %v1085
    %v1087 = vmul.f32 %v1083, %v1086
    %1088 = vst [vmem:[#allocation2] sm:$0xff] %v1087
    // Predicated region
    $region22: #{tpu_custom_call.1} parent=1 // pred_check
      _
    $region23: #{tpu_custom_call.1} parent=1 // pred_check_branch
      %1090 = sbr.rel (0) target = $region25
    $region24: #{tpu_custom_call.1} parent=1 // pred_region
      %s1092 = ssub.s32 128, 128
      %1093 = vsyncadd [#allocation3], %s1092
      %s1095 = sshll.u32 [#allocation2], 4
      %s1096 = int_to_ptr.vmem [resolvable:$true] %s1095
      %1098 = dma.vmem_to_hbm [thread:$0]  %s1096, 128, %s5, [#allocation3]
    $region25: #{tpu_custom_call.1} parent=1 // pred_fallthru
      _
    // Predicated region
    $region26: #{tpu_custom_call.1} parent=1 // pred_check
      _
    $region27: #{tpu_custom_call.1} parent=1 // pred_check_branch
      %1100 = sbr.rel (0) target = $region29
    $region28: #{tpu_custom_call.1} parent=1 // pred_region
      %1101 = dma.done [#allocation3], 128
    $region29: #{tpu_custom_call.1} parent=1 // pred_fallthru
      _
    %1102 = vsyncpa [#allocation3], 1

</llo_original>
